<compile_context>
chip_gen: v6e
topology: v6e:2x2x1
jax: 0.10.0
libtpu: 0.0.40
codegen_flags: <defaults>
</compile_context>

<pallas_src>
import jax
import jax.numpy as jnp
from jax.experimental import pallas as pl
from jax.experimental.pallas import tpu as pltpu


def _round_up(x, m):
    return ((x + m - 1) // m) * m


def _ensemble_kernel(s_ref, k_ref, w1s_ref, w1k_ref, b1_ref, w2_ref, b2_ref, o_ref):
    # s_ref/k_ref: (TB, 48), w1s/w1k: (48, 32), b1: (1, 32),
    # w2: (32, 2), b2: (1, 2), o_ref: (TB, 2)

    # bf16 for the MXU (free cast if inputs already arrive as bf16).
    s = s_ref[...].astype(jnp.bfloat16)
    k = k_ref[...].astype(jnp.bfloat16)

    # Fused concat: cat([s, k], 1) @ W1.T == s @ W1s + k @ W1k   (f32 accumulation)
    h = jnp.dot(s, w1s_ref[...], preferred_element_type=jnp.float32)
    h = h + jnp.dot(k, w1k_ref[...], preferred_element_type=jnp.float32)
    h = h + b1_ref[...]
    h = jnp.maximum(h, 0.0)                       # ReLU in f32

    logits = jnp.dot(h.astype(jnp.bfloat16), w2_ref[...],
                     preferred_element_type=jnp.float32) + b2_ref[...]

    # 2-class softmax == sigmoid of the logit difference (no XLU reductions).
    d = logits[:, 1:2] - logits[:, 0:1]
    p1 = pl.reciprocal(1.0 + jnp.exp(-d), approx=True)
    p0 = 1.0 - p1
    o_ref[...] = jnp.concatenate([p0, p1], axis=1).astype(o_ref.dtype)


def prepare_params(w1, b1, w2, b2):
    """One-time re-layout of PyTorch-style Linear params for the kernel.

    w1: (32, 96), b1: (32,), w2: (2, 32), b2: (2,)
    Returns (w1s, w1k, b1_2d, w2_t, b2_2d): bf16 weight halves in x@W layout
    plus f32 2-D biases. Call once, reuse across forward calls.
    """
    w1_t = jnp.asarray(w1).T                        # (96, 32)
    w1s = w1_t[:48, :].astype(jnp.bfloat16)         # (48, 32)  for s_input
    w1k = w1_t[48:, :].astype(jnp.bfloat16)         # (48, 32)  for k_input
    w2_t = jnp.asarray(w2).T.astype(jnp.bfloat16)   # (32, 2)
    b1_2d = jnp.asarray(b1).reshape(1, 32).astype(jnp.float32)
    b2_2d = jnp.asarray(b2).reshape(1, 2).astype(jnp.float32)
    return w1s, w1k, b1_2d, w2_t, b2_2d


def ensemble_forward(s_input, k_input, w1s, w1k, b1_2d, w2_t, b2_2d,
                     *, block_rows=1024):
    """s_input, k_input: (B, 48) -> (B, 2) softmax probabilities."""
    B = s_input.shape[0]
    tb = min(block_rows, _round_up(B, 8))   # batch tile, multiple of 8
    grid = (pl.cdiv(B, tb),)

    tiled = lambda i: (i, 0)                # batch-tiled activations / output
    const = lambda i: (0, 0)                # weights/biases: resident every step

    return pl.pallas_call(
        _ensemble_kernel,
        out_shape=jax.ShapeDtypeStruct((B, 2), jnp.float32),
        grid=grid,
        in_specs=[
            pl.BlockSpec((tb, 48), tiled),   # s_input
            pl.BlockSpec((tb, 48), tiled),   # k_input
            pl.BlockSpec((48, 32), const),   # w1s
            pl.BlockSpec((48, 32), const),   # w1k
            pl.BlockSpec((1, 32), const),    # b1
            pl.BlockSpec((32, 2), const),    # w2
            pl.BlockSpec((1, 2), const),     # b2
        ],
        out_specs=pl.BlockSpec((tb, 2), tiled),
        compiler_params=pltpu.CompilerParams(
            dimension_semantics=("parallel",)),  # megacore-shard batch on v7x
    )(s_input, k_input, w1s, w1k, b1_2d, w2_t, b2_2d)


def init_params(key):
    """Deterministic PyTorch-style (uniform +/- 1/sqrt(fan_in)) init."""
    k1, k2, k3, k4 = jax.random.split(key, 4)
    bound1 = 1.0 / jnp.sqrt(96.0)
    bound2 = 1.0 / jnp.sqrt(32.0)
    w1 = jax.random.uniform(k1, (32, 96), jnp.float32, -bound1, bound1)
    b1 = jax.random.uniform(k2, (32,), jnp.float32, -bound1, bound1)
    w2 = jax.random.uniform(k3, (2, 32), jnp.float32, -bound2, bound2)
    b2 = jax.random.uniform(k4, (2,), jnp.float32, -bound2, bound2)
    return w1, b1, w2, b2


if __name__ == "__main__":
    key = jax.random.PRNGKey(0)
    k_params, k_s, k_k = jax.random.split(key, 3)

    w1, b1, w2, b2 = init_params(k_params)
    params = prepare_params(w1, b1, w2, b2)   # one-time weight re-layout

    B = 8
    s_input = jax.random.normal(k_s, (B, 48), jnp.float32).astype(jnp.bfloat16)
    k_input = jax.random.normal(k_k, (B, 48), jnp.float32).astype(jnp.bfloat16)

    fwd = jax.jit(ensemble_forward)
    out = jax.block_until_ready(fwd(s_input, k_input, *params))

    # Reference: same bf16-quantized inputs/weights, f32 math, plain softmax.
    w1s, w1k, b1_2d, w2_t, b2_2d = params
    x32 = jnp.concatenate([s_input.astype(jnp.float32),
                           k_input.astype(jnp.float32)], axis=1)      # (B, 96)
    w1_t32 = jnp.concatenate([w1s, w1k], axis=0).astype(jnp.float32)  # (96, 32)
    h_ref = jnp.maximum(x32 @ w1_t32 + b1_2d, 0.0)
    logits_ref = h_ref @ w2_t.astype(jnp.float32) + b2_2d
    ref = jax.nn.softmax(logits_ref, axis=1)

    assert out.shape == (B, 2)
    assert bool(jnp.allclose(jnp.sum(out, axis=1), 1.0, atol=1e-5))
    assert bool(jnp.allclose(out, ref, atol=1e-2, rtol=1e-2))

    print("KERNEL_OK")
</pallas_src>

<mosaic_0001>
module attributes {stable_mosaic.version = 11 : i64} {
  func.func @_ensemble_kernel(%arg0: i32, %arg1: memref<8x48xbf16, #tpu.memory_space<vmem>>, %arg2: memref<8x48xbf16, #tpu.memory_space<vmem>>, %arg3: memref<48x32xbf16, #tpu.memory_space<vmem>>, %arg4: memref<48x32xbf16, #tpu.memory_space<vmem>>, %arg5: memref<1x32xf32, #tpu.memory_space<vmem>>, %arg6: memref<32x2xbf16, #tpu.memory_space<vmem>>, %arg7: memref<1x2xf32, #tpu.memory_space<vmem>>, %arg8: memref<8x2xf32, #tpu.memory_space<vmem>>) attributes {dimension_semantics = [#tpu.dimension_semantics<parallel>], iteration_bounds = array<i64: 1>, scalar_prefetch = 0 : i64, scratch_operands = 0 : i64, tpu.core_type = #tpu.core_type<tc>, window_params = [{transform_indices = @transform_0, window_bounds = array<i64: 8, 48>}, {transform_indices = @transform_1, window_bounds = array<i64: 8, 48>}, {pipeline_mode = #tpu.pipeline_mode<synchronous>, transform_indices = @transform_2, window_bounds = array<i64: 48, 32>}, {pipeline_mode = #tpu.pipeline_mode<synchronous>, transform_indices = @transform_3, window_bounds = array<i64: 48, 32>}, {pipeline_mode = #tpu.pipeline_mode<synchronous>, transform_indices = @transform_4, window_bounds = array<i64: 1, 32>}, {pipeline_mode = #tpu.pipeline_mode<synchronous>, transform_indices = @transform_5, window_bounds = array<i64: 32, 2>}, {pipeline_mode = #tpu.pipeline_mode<synchronous>, transform_indices = @transform_6, window_bounds = array<i64: 1, 2>}, {transform_indices = @transform_7, window_bounds = array<i64: 8, 2>}]} {
    %c0 = arith.constant 0 : index
    %c0_0 = arith.constant 0 : index
    %0 = vector.load %arg1[%c0, %c0_0] : memref<8x48xbf16, #tpu.memory_space<vmem>>, vector<8x48xbf16>
    %c0_1 = arith.constant 0 : index
    %c0_2 = arith.constant 0 : index
    %1 = vector.load %arg2[%c0_1, %c0_2] : memref<8x48xbf16, #tpu.memory_space<vmem>>, vector<8x48xbf16>
    %c0_3 = arith.constant 0 : index
    %c0_4 = arith.constant 0 : index
    %2 = vector.load %arg3[%c0_3, %c0_4] : memref<48x32xbf16, #tpu.memory_space<vmem>>, vector<48x32xbf16>
    %cst = arith.constant dense<0.000000e+00> : vector<8x32xf32>
    %3 = tpu.matmul %0, %2, %cst {dimension_numbers = #tpu.dot_dimension_numbers<[1], [0], [0], [1], [0, 0, 1, 1], [], []>} : vector<8x48xbf16>, vector<48x32xbf16>, vector<8x32xf32> -> vector<8x32xf32>
    %c0_5 = arith.constant 0 : index
    %c0_6 = arith.constant 0 : index
    %4 = vector.load %arg4[%c0_5, %c0_6] : memref<48x32xbf16, #tpu.memory_space<vmem>>, vector<48x32xbf16>
    %cst_7 = arith.constant dense<0.000000e+00> : vector<8x32xf32>
    %5 = tpu.matmul %1, %4, %cst_7 {dimension_numbers = #tpu.dot_dimension_numbers<[1], [0], [0], [1], [0, 0, 1, 1], [], []>} : vector<8x48xbf16>, vector<48x32xbf16>, vector<8x32xf32> -> vector<8x32xf32>
    %6 = arith.addf %3, %5 : vector<8x32xf32>
    %c0_8 = arith.constant 0 : index
    %c0_9 = arith.constant 0 : index
    %7 = vector.load %arg5[%c0_8, %c0_9] : memref<1x32xf32, #tpu.memory_space<vmem>>, vector<1x32xf32>
    %8 = vector.broadcast %7 : vector<1x32xf32> to vector<8x32xf32>
    %9 = arith.addf %6, %8 : vector<8x32xf32>
    %cst_10 = arith.constant 0.000000e+00 : f32
    %10 = vector.broadcast %cst_10 : f32 to vector<8x32xf32>
    %11 = arith.maximumf %9, %10 : vector<8x32xf32>
    %12 = arith.truncf %11 : vector<8x32xf32> to vector<8x32xbf16>
    %c0_11 = arith.constant 0 : index
    %c0_12 = arith.constant 0 : index
    %13 = vector.load %arg6[%c0_11, %c0_12] : memref<32x2xbf16, #tpu.memory_space<vmem>>, vector<32x2xbf16>
    %cst_13 = arith.constant dense<0.000000e+00> : vector<8x2xf32>
    %14 = tpu.matmul %12, %13, %cst_13 {dimension_numbers = #tpu.dot_dimension_numbers<[1], [0], [0], [1], [0, 0, 1, 1], [], []>} : vector<8x32xbf16>, vector<32x2xbf16>, vector<8x2xf32> -> vector<8x2xf32>
    %c0_14 = arith.constant 0 : index
    %c0_15 = arith.constant 0 : index
    %15 = vector.load %arg7[%c0_14, %c0_15] : memref<1x2xf32, #tpu.memory_space<vmem>>, vector<1x2xf32>
    %16 = vector.broadcast %15 : vector<1x2xf32> to vector<8x2xf32>
    %17 = arith.addf %14, %16 : vector<8x2xf32>
    %18 = vector.extract_strided_slice %17 {offsets = [0, 1], sizes = [8, 1], strides = [1, 1]} : vector<8x2xf32> to vector<8x1xf32>
    %19 = vector.extract_strided_slice %17 {offsets = [0, 0], sizes = [8, 1], strides = [1, 1]} : vector<8x2xf32> to vector<8x1xf32>
    %20 = arith.subf %18, %19 : vector<8x1xf32>
    %cst_16 = arith.constant 0.000000e+00 : f32
    %21 = vector.broadcast %cst_16 : f32 to vector<8x1xf32>
    %22 = arith.subf %21, %20 : vector<8x1xf32>
    %23 = math.exp %22 : vector<8x1xf32>
    %cst_17 = arith.constant 1.000000e+00 : f32
    %24 = vector.broadcast %cst_17 : f32 to vector<8x1xf32>
    %25 = arith.addf %24, %23 : vector<8x1xf32>
    %26 = tpu.reciprocal %25 {approx = true} : vector<8x1xf32> -> vector<8x1xf32>
    %cst_18 = arith.constant 1.000000e+00 : f32
    %27 = vector.broadcast %cst_18 : f32 to vector<8x1xf32>
    %28 = arith.subf %27, %26 : vector<8x1xf32>
    %29 = tpu.concatenate %28, %26 in 1 : vector<8x1xf32>, vector<8x1xf32> -> vector<8x2xf32>
    %c0_19 = arith.constant 0 : index
    %c0_20 = arith.constant 0 : index
    %30 = vector.load %arg8[%c0_19, %c0_20] : memref<8x2xf32, #tpu.memory_space<vmem>>, vector<8x2xf32>
    tpu.vector_store %arg8[%c0_19, %c0_20], %29 {strides = array<i32>} : memref<8x2xf32, #tpu.memory_space<vmem>>, vector<8x2xf32>,
    return
  }
  func.func @transform_0(%arg0: i32) -> (i32, i32) {
    %c0_i32 = arith.constant 0 : i32
    %c0_i32_0 = arith.constant 0 : i32
    return %arg0, %c0_i32 : i32, i32
  }
  func.func @transform_1(%arg0: i32) -> (i32, i32) {
    %c0_i32 = arith.constant 0 : i32
    %c0_i32_0 = arith.constant 0 : i32
    return %arg0, %c0_i32 : i32, i32
  }
  func.func @transform_2(%arg0: i32) -> (i32, i32) {
    %c0_i32 = arith.constant 0 : i32
    %c0_i32_0 = arith.constant 0 : i32
    %c0_i32_1 = arith.constant 0 : i32
    return %c0_i32, %c0_i32_0 : i32, i32
  }
  func.func @transform_3(%arg0: i32) -> (i32, i32) {
    %c0_i32 = arith.constant 0 : i32
    %c0_i32_0 = arith.constant 0 : i32
    %c0_i32_1 = arith.constant 0 : i32
    return %c0_i32, %c0_i32_0 : i32, i32
  }
  func.func @transform_4(%arg0: i32) -> (i32, i32) {
    %c0_i32 = arith.constant 0 : i32
    %c0_i32_0 = arith.constant 0 : i32
    %c0_i32_1 = arith.constant 0 : i32
    return %c0_i32, %c0_i32_0 : i32, i32
  }
  func.func @transform_5(%arg0: i32) -> (i32, i32) {
    %c0_i32 = arith.constant 0 : i32
    %c0_i32_0 = arith.constant 0 : i32
    %c0_i32_1 = arith.constant 0 : i32
    return %c0_i32, %c0_i32_0 : i32, i32
  }
  func.func @transform_6(%arg0: i32) -> (i32, i32) {
    %c0_i32 = arith.constant 0 : i32
    %c0_i32_0 = arith.constant 0 : i32
    %c0_i32_1 = arith.constant 0 : i32
    return %c0_i32, %c0_i32_0 : i32, i32
  }
  func.func @transform_7(%arg0: i32) -> (i32, i32) {
    %c0_i32 = arith.constant 0 : i32
    %c0_i32_0 = arith.constant 0 : i32
    return %arg0, %c0_i32 : i32, i32
  }
}

</mosaic_0001>

<llo_original>
// kernel: ensemble_forward.1
$region0: #{ensemble_forward.1}
  #allocation0 [shape = 'u32[]', space=smem, size = 0x4, offset = 0x4, fixed_abs, tag = 'smem constant byte address 0x4 - core index']
  #allocation1 [shape = 'u32[144,128]{1,0:T(1,128)}', space=vmem, size = 0x12000, scoped, tag = 'internal scratch']
  %s0 = inlined_call_operand.vmem [shape: bf16[8,48], index: 0, kind: input, shape index: {}]
  %s1 = inlined_call_operand.vmem [shape: bf16[8,48], index: 1, kind: input, shape index: {}]
  %s2 = inlined_call_operand.vmem [shape: bf16[48,32], index: 2, kind: input, shape index: {}]
  %s3 = inlined_call_operand.vmem [shape: bf16[48,32], index: 3, kind: input, shape index: {}]
  %s4 = inlined_call_operand.vmem [shape: f32[1,32], index: 4, kind: input, shape index: {}]
  %s5 = inlined_call_operand.vmem [shape: bf16[32,2], index: 5, kind: input, shape index: {}]
  %s6 = inlined_call_operand.vmem [shape: f32[1,2], index: 6, kind: input, shape index: {}]
  %s7 = inlined_call_operand.vmem [shape: f32[8,2], index: 7, kind: output, shape index: {}]
  %s8 = sld [smem:[#allocation0]]
  $region38: #{ensemble_forward.1} parent=0
    _
  %s10 = ssub.s32 1, %s8
  %s11 = scalar_select 0, %s10, %s8
  // Predicated region
  $region2: #{ensemble_forward.1} parent=0 // pred_check
    _
  $region3: #{ensemble_forward.1} parent=0 // pred_check_branch
    %13 = sbr.rel (0) target = $region5
  $region4: #{ensemble_forward.1} parent=0 // pred_region
    _
  $region5: #{ensemble_forward.1} parent=0 // pred_fallthru
    _
  // Predicated region
  $region6: #{ensemble_forward.1} parent=0 // pred_check
    _
  $region7: #{ensemble_forward.1} parent=0 // pred_check_branch
    %15 = sbr.rel (0) target = $region9
  $region8: #{ensemble_forward.1} parent=0 // pred_region
    _
  $region9: #{ensemble_forward.1} parent=0 // pred_fallthru
    _
  // Predicated region
  $region10: #{ensemble_forward.1} parent=0 // pred_check
    _
  $region11: #{ensemble_forward.1} parent=0 // pred_check_branch
    %17 = sbr.rel (0) target = $region13
  $region12: #{ensemble_forward.1} parent=0 // pred_region
    _
  $region13: #{ensemble_forward.1} parent=0 // pred_fallthru
    _
  // Predicated region
  $region14: #{ensemble_forward.1} parent=0 // pred_check
    _
  $region15: #{ensemble_forward.1} parent=0 // pred_check_branch
    %19 = sbr.rel (0) target = $region17
  $region16: #{ensemble_forward.1} parent=0 // pred_region
    _
  $region17: #{ensemble_forward.1} parent=0 // pred_fallthru
    _
  // Predicated region
  $region18: #{ensemble_forward.1} parent=0 // pred_check
    _
  $region19: #{ensemble_forward.1} parent=0 // pred_check_branch
    %21 = sbr.rel (0) target = $region21
  $region20: #{ensemble_forward.1} parent=0 // pred_region
    _
  $region21: #{ensemble_forward.1} parent=0 // pred_fallthru
    _
  // Predicated region
  $region22: #{ensemble_forward.1} parent=0 // pred_check
    _
  $region23: #{ensemble_forward.1} parent=0 // pred_check_branch
    %23 = sbr.rel (0) target = $region25
  $region24: #{ensemble_forward.1} parent=0 // pred_region
    _
  $region25: #{ensemble_forward.1} parent=0 // pred_fallthru
    _
  // Predicated region
  $region26: #{ensemble_forward.1} parent=0 // pred_check
    _
  $region27: #{ensemble_forward.1} parent=0 // pred_check_branch
    %25 = sbr.rel (0) target = $region29
  $region28: #{ensemble_forward.1} parent=0 // pred_region
    _
  $region29: #{ensemble_forward.1} parent=0 // pred_fallthru
    _
  %v27 = vld [vmem:[%s0] sm:$0xf]
  %v28 = vld [vmem:[%s1] sm:$0xf]
  %v29 = vld [vmem:[%s2] sm:$0xf]
  %v30 = vld [vmem:[%s2 + $0x4] sm:$0xf]
  %v31 = vld [vmem:[%s2 + $0x8] sm:$0xf]
  %v32 = vld [vmem:[%s2 + $0xc] sm:$0xf]
  %v33 = vld [vmem:[%s2 + $0x10] sm:$0xf]
  %v34 = vld [vmem:[%s2 + $0x14] sm:$0xf]
  %v35 = vld [vmem:[%s3] sm:$0xf]
  %v36 = vld [vmem:[%s3 + $0x4] sm:$0xf]
  %v37 = vld [vmem:[%s3 + $0x8] sm:$0xf]
  %v38 = vld [vmem:[%s3 + $0xc] sm:$0xf]
  %v39 = vld [vmem:[%s3 + $0x10] sm:$0xf]
  %v40 = vld [vmem:[%s3 + $0x14] sm:$0xf]
  %v47 = vunpack.c.l.b16 %v35
  %v48 = vunpack.c.l.b16 %v36
  %v49 = vunpack.c.l.b16 %v37
  %v50 = vunpack.c.l.b16 %v38
  %v51 = vunpack.c.l.b16 %v39
  %v52 = vunpack.c.l.b16 %v40
  %v53 = vpack.c.b16 %v48, %v47
  %v54 = vpack.c.b16 %v50, %v49
  %v55 = vpack.c.b16 %v52, %v51
  %vm59 = vcmask 392192
  %v61 = vsel %vm59, %v28, 0
  %63 = vmatprep.subr.bf16.mxu0 0
  %64 = vmatpush1.bf16.msra.mxu0 0
  %65 = vmatprep.subr.bf16.mxu0 0
  %66 = vmatpush1.bf16.msra.mxu0 0
  %67 = vmatprep.subr.bf16.mxu0 0
  %68 = vmatpush1.bf16.msra.mxu0 0
  %69 = vmatprep.subr.bf16.mxu0 0
  %70 = vmatpush1.bf16.msra.mxu0 0
  %71 = vmatprep.subr.bf16.mxu0 0
  %72 = vmatpush1.bf16.msra.mxu0 0
  %73 = vmatprep.subr.bf16.mxu0 0
  %74 = vmatpush1.bf16.msra.mxu0 %v55
  %75 = vmatprep.subr.bf16.mxu0 0
  %76 = vmatpush1.bf16.msra.mxu0 %v54
  %77 = vmatprep.subr.bf16.mxu0 0
  %78 = vmatpush1.bf16.msra.mxu0 %v53
  %79 = vmatprep.subr.bf16.mxu0 0
  %80 = vmatpush2.bf16.msra.mxu0 0
  %81 = vmatprep.subr.bf16.mxu0 0
  %82 = vmatpush2.bf16.msra.mxu0 0
  %83 = vmatprep.subr.bf16.mxu0 0
  %84 = vmatpush2.bf16.msra.mxu0 0
  %85 = vmatprep.subr.bf16.mxu0 0
  %86 = vmatpush2.bf16.msra.mxu0 0
  %87 = vmatprep.subr.bf16.mxu0 0
  %88 = vmatpush2.bf16.msra.mxu0 0
  %89 = vmatprep.subr.bf16.mxu0 0
  %90 = vmatpush2.bf16.msra.mxu0 0
  %91 = vmatprep.subr.bf16.mxu0 0
  %92 = vmatpush2.bf16.msra.mxu0 0
  %93 = vmatprep.subr.bf16.mxu0 0
  %94 = vmatpush2.bf16.msra.mxu0 0
  %95 = vmatprep.mubr.bf16.mxu0 0
  %96 = vmatmul.mubr.bf16.gmra.mxu0 %v61
  %v97 = vpop.f32.mrf.mxu0
  %v98 = vadd.f32 0.0, %v97
  %v99 = vpop.f32.mrf.mxu0
  %v100 = vpop.f32.mrf.mxu0
  %v101 = vpop.f32.mrf.mxu0
  %102 = vdwg.mxu0
  %v109 = vunpack.c.l.b16 %v29
  %v110 = vunpack.c.l.b16 %v30
  %v111 = vunpack.c.l.b16 %v31
  %v112 = vunpack.c.l.b16 %v32
  %v113 = vunpack.c.l.b16 %v33
  %v114 = vunpack.c.l.b16 %v34
  %v115 = vpack.c.b16 %v110, %v109
  %v116 = vpack.c.b16 %v112, %v111
  %v117 = vpack.c.b16 %v114, %v113
  %v122 = vsel %vm59, %v27, 0
  %124 = vmatprep.subr.bf16.mxu0 0
  %125 = vmatpush1.bf16.msra.mxu0 0
  %126 = vmatprep.subr.bf16.mxu0 0
  %127 = vmatpush1.bf16.msra.mxu0 0
  %128 = vmatprep.subr.bf16.mxu0 0
  %129 = vmatpush1.bf16.msra.mxu0 0
  %130 = vmatprep.subr.bf16.mxu0 0
  %131 = vmatpush1.bf16.msra.mxu0 0
  %132 = vmatprep.subr.bf16.mxu0 0
  %133 = vmatpush1.bf16.msra.mxu0 0
  %134 = vmatprep.subr.bf16.mxu0 0
  %135 = vmatpush1.bf16.msra.mxu0 %v117
  %136 = vmatprep.subr.bf16.mxu0 0
  %137 = vmatpush1.bf16.msra.mxu0 %v116
  %138 = vmatprep.subr.bf16.mxu0 0
  %139 = vmatpush1.bf16.msra.mxu0 %v115
  %140 = vmatprep.subr.bf16.mxu0 0
  %141 = vmatpush2.bf16.msra.mxu0 0
  %142 = vmatprep.subr.bf16.mxu0 0
  %143 = vmatpush2.bf16.msra.mxu0 0
  %144 = vmatprep.subr.bf16.mxu0 0
  %145 = vmatpush2.bf16.msra.mxu0 0
  %146 = vmatprep.subr.bf16.mxu0 0
  %147 = vmatpush2.bf16.msra.mxu0 0
  %148 = vmatprep.subr.bf16.mxu0 0
  %149 = vmatpush2.bf16.msra.mxu0 0
  %150 = vmatprep.subr.bf16.mxu0 0
  %151 = vmatpush2.bf16.msra.mxu0 0
  %152 = vmatprep.subr.bf16.mxu0 0
  %153 = vmatpush2.bf16.msra.mxu0 0
  %154 = vmatprep.subr.bf16.mxu0 0
  %155 = vmatpush2.bf16.msra.mxu0 0
  %156 = vmatprep.mubr.bf16.mxu0 0
  %157 = vmatmul.mubr.bf16.gmra.mxu0 %v122
  %v158 = vpop.f32.mrf.mxu0
  %v159 = vadd.f32 %v98, %v158
  %v160 = vpop.f32.mrf.mxu0
  %v161 = vpop.f32.mrf.mxu0
  %v162 = vpop.f32.mrf.mxu0
  %163 = vdwg.mxu0
  %v164 = vld [vmem:[%s4] sm:$0x1]
  %v166 = vlaneseq
  %v167 = vshrl.u32 %v166, 7
  %v168 = vsub.s32 0, %v167
  %v169 = vrot.slane %v164, %v168
  %v171 = vadd.f32 %v159, %v169
  %v172 = vmax.f32 %v171, 0.0
  %v173 = vpack.c.bf16 %v172, %v172
  %v174 = vld [vmem:[%s5] sm:$0xf]
  %v175 = vld [vmem:[%s5 + $0x4] sm:$0xf]
  %v176 = vld [vmem:[%s5 + $0x8] sm:$0xf]
  %v177 = vld [vmem:[%s5 + $0xc] sm:$0xf]
  %v178 = vld [vmem:[%s6] sm:$0x1]
  %v180 = vlaneseq
  %v181 = vshrl.u32 %v180, 7
  %v182 = vsub.s32 0, %v181
  %v183 = vrot.slane %v178, %v182
  %v189 = vunpack.c.l.b16 %v174
  %v190 = vunpack.c.l.b16 %v175
  %v191 = vunpack.c.l.b16 %v176
  %v192 = vunpack.c.l.b16 %v177
  %v193 = vpack.c.b16 %v190, %v189
  %v194 = vpack.c.b16 %v192, %v191
  %vm197 = vcmask 261120
  %v199 = vsel %vm197, %v173, 0
  %201 = vmatprep.subr.bf16.mxu0 0
  %202 = vmatpush1.bf16.msra.mxu0 0
  %203 = vmatprep.subr.bf16.mxu0 0
  %204 = vmatpush1.bf16.msra.mxu0 0
  %205 = vmatprep.subr.bf16.mxu0 0
  %206 = vmatpush1.bf16.msra.mxu0 0
  %207 = vmatprep.subr.bf16.mxu0 0
  %208 = vmatpush1.bf16.msra.mxu0 0
  %209 = vmatprep.subr.bf16.mxu0 0
  %210 = vmatpush1.bf16.msra.mxu0 0
  %211 = vmatprep.subr.bf16.mxu0 0
  %212 = vmatpush1.bf16.msra.mxu0 0
  %213 = vmatprep.subr.bf16.mxu0 0
  %214 = vmatpush1.bf16.msra.mxu0 %v194
  %215 = vmatprep.subr.bf16.mxu0 0
  %216 = vmatpush1.bf16.msra.mxu0 %v193
  %217 = vmatprep.subr.bf16.mxu0 0
  %218 = vmatpush2.bf16.msra.mxu0 0
  %219 = vmatprep.subr.bf16.mxu0 0
  %220 = vmatpush2.bf16.msra.mxu0 0
  %221 = vmatprep.subr.bf16.mxu0 0
  %222 = vmatpush2.bf16.msra.mxu0 0
  %223 = vmatprep.subr.bf16.mxu0 0
  %224 = vmatpush2.bf16.msra.mxu0 0
  %225 = vmatprep.subr.bf16.mxu0 0
  %226 = vmatpush2.bf16.msra.mxu0 0
  %227 = vmatprep.subr.bf16.mxu0 0
  %228 = vmatpush2.bf16.msra.mxu0 0
  %229 = vmatprep.subr.bf16.mxu0 0
  %230 = vmatpush2.bf16.msra.mxu0 0
  %231 = vmatprep.subr.bf16.mxu0 0
  %232 = vmatpush2.bf16.msra.mxu0 0
  %233 = vmatprep.mubr.bf16.mxu0 0
  %234 = vmatmul.mubr.bf16.gmra.mxu0 %v199
  %v235 = vpop.f32.mrf.mxu0
  %v236 = vadd.f32 %v183, %v235
  %v237 = vpop.f32.mrf.mxu0
  %v238 = vpop.f32.mrf.mxu0
  %v239 = vpop.f32.mrf.mxu0
  %240 = vdwg.mxu0
  %242 = vrot.lane.b32.xlu0 %v236, 1
  %v243 = vpop.permute.xlu0 %242
  %v245 = vsub.f32 %v236, %v243
  %v246 = vsub.f32 0.0, %v245
  %v247 = vmul.f32 %v246, 1.442695
  %v248 = vpow.pop %v247
  %v249 = vadd.f32 %v248, 1.0
  %v250 = vrcp.pop %v249
  %v251 = vsub.f32 1.0, %v250
  %253 = vrot.lane.b32.xlu0 %v251, 127
  %v254 = vpop.permute.xlu0 %253
  %vm256 = vcmask 7168
  %v257 = vsel %vm256, %v254, %v250
  %vm258 = vcmask 15360
  %259 = vst.msk [vmem:[%s7] sm:$0xff] %vm258, %v257
  // Predicated region
  $region30: #{ensemble_forward.1} parent=0 // pred_check
    _
  $region31: #{ensemble_forward.1} parent=0 // pred_check_branch
    %261 = sbr.rel (0) target = $region33
  $region32: #{ensemble_forward.1} parent=0 // pred_region
    _
  $region33: #{ensemble_forward.1} parent=0 // pred_fallthru
    _
  // Predicated region
  $region34: #{ensemble_forward.1} parent=0 // pred_check
    _
  $region35: #{ensemble_forward.1} parent=0 // pred_check_branch
    %263 = sbr.rel (0) target = $region37
  $region36: #{ensemble_forward.1} parent=0 // pred_region
    _
  $region37: #{ensemble_forward.1} parent=0 // pred_fallthru
    _

</llo_original>
